<compile_context>
chip_gen: v5e
topology: v5e:2x2
jax: 0.10.0
libtpu: 0.0.40
codegen_flags: <defaults>
</compile_context>

<pallas_src>
import numpy as np
import jax
import jax.numpy as jnp
from jax.experimental import pallas as pl
from jax.experimental.pallas import tpu as pltpu

# ----- model dims (from Linear(110 + 50, ...)) -------------------------------
OBS_DIM = 110
NEG_ROWS = 5
NEG_COLS = 10
NEG_DIM = NEG_ROWS * NEG_COLS      # 50
HID1 = OBS_DIM + NEG_DIM           # 160
HID2 = 64
ACTION_SPACE = 8

# ----- lane-padded dims -------------------------------------------------------
OBS_PAD = 128                      # 110 -> 128
NEG_PAD = 128                      # 50  -> 128
HID1_PAD = 256                     # 160 -> 256
EMB_PAD = 128                      # 64  -> 128
HEAD_PAD = 128                     # 8+1+10 -> 128 (fused heads)
SLAB_W_ROWS = 640                  # packed weight slab rows
SLAB_B_ROWS = 8                    # packed bias slab rows
SLAB_COLS = 256


# =============================================================================
# Kernel
# =============================================================================
def mlp2_kernel(obs_ref, neg_ref, w_ref, b_ref, out_ref):
    """One batch tile: (tb, 128) obs + (tb, 128) masked/noisy negotiation."""
    tb = obs_ref.shape[0]

    obs = obs_ref[...]                                         # (tb, 128)
    neg = neg_ref[...]                                         # (tb, 128)

    # ---- packed parameter views (all slices (8,128)-tile aligned) ----------
    wn_obs = w_ref[0:128, 0:128]       # mlp_neg, obs part   (110x50 real)
    wn_neg = w_ref[0:128, 128:256]     # mlp_neg, neg part   (50x50 real)
    w1_obs = w_ref[128:256, :]         # mlp L1, obs part    (110x160 real)
    w1_neg = w_ref[256:384, :]         # mlp L1, neg part    (50x160 real)
    w2 = w_ref[384:640, 0:128]         # mlp L2              (160x64 real)
    wh = w_ref[384:512, 128:256]       # fused heads         (64x19 real)
    bn = b_ref[0:1, 0:128]
    b1 = b_ref[1:2, :]
    b2 = b_ref[2:3, 0:128]
    bh = b_ref[3:4, 0:128]

    def dot(a, w):
        return jnp.dot(a, w, preferred_element_type=jnp.float32)

    # mlp_neg: tanh(Linear(cat(obs, neg))) * neg   (weight split == concat)
    neg_h = jnp.tanh(dot(obs, wn_obs) + dot(neg, wn_neg) + bn)
    neg_gate = neg_h * neg                                     # (tb, 128)

    # mlp: Linear(160->160) -> ReLU -> Linear(160->64) -> ReLU
    h1 = jnp.maximum(dot(obs, w1_obs) + dot(neg_gate, w1_neg) + b1, 0.0)
    emb = jnp.maximum(dot(h1, w2) + b2, 0.0)                   # (tb, 128)

    # fused heads: lanes [0,8)=policy, 8=value, [9,19)=tanh(negotiation)
    raw = dot(emb, wh) + bh                                    # (tb, 128)
    lane = jax.lax.broadcasted_iota(jnp.int32, (tb, HEAD_PAD), 1)
    is_neg_head = (lane >= ACTION_SPACE + 1) & \
                  (lane < ACTION_SPACE + 1 + NEG_COLS)
    out_ref[...] = jnp.where(is_neg_head, jnp.tanh(raw), raw)


# =============================================================================
# Wrapper
# =============================================================================
def make_mlp2_forward(*, agent_id, negotiation_map, noise_scale=0.1):
    # Static per-row keep mask (rows not in the negotiation map, or when the
    # agent itself is not in the map, are replaced by the zero dummy row).
    row_keep_np = np.array(
        [1.0 if (i in negotiation_map and agent_id in negotiation_map) else 0.0
         for i in range(NEG_ROWS)], np.float32)
    row_keep = jnp.asarray(row_keep_np)
    noise_scale = float(noise_scale)

    @jax.jit
    def forward(obs, negotiation, packed, key):
        B = obs.shape[0]
        if B % 8 != 0:
            raise ValueError("batch must be a multiple of 8 (f32 sublane)")
        tb = min(B, 256)
        while B % tb:
            tb -= 8
        grid = (B // tb,)

        # --- negotiation preprocessing (noise + static row mask), in-wrapper
        #     so the kernel stays free of TPU-only PRNG primitives. ---------
        neg = negotiation.astype(jnp.float32)
        if noise_scale != 0.0:
            neg = neg + jax.random.normal(key, neg.shape, jnp.float32) * noise_scale
        neg = neg * row_keep[None, :, None]                    # (B, 5, 10)

        obs_p = jnp.pad(obs.astype(jnp.float32),
                        ((0, 0), (0, OBS_PAD - OBS_DIM)))
        neg_p = jnp.pad(neg.reshape(B, NEG_DIM),
                        ((0, 0), (0, NEG_PAD - NEG_DIM)))

        out = pl.pallas_call(
            mlp2_kernel,
            out_shape=jax.ShapeDtypeStruct((B, HEAD_PAD), jnp.float32),
            grid_spec=pltpu.PrefetchScalarGridSpec(
                num_scalar_prefetch=0,
                grid=grid,
                in_specs=[
                    pl.BlockSpec((tb, OBS_PAD), lambda i: (i, 0)),
                    pl.BlockSpec((tb, NEG_PAD), lambda i: (i, 0)),
                    pl.BlockSpec((SLAB_W_ROWS, SLAB_COLS), lambda i: (0, 0)),
                    pl.BlockSpec((SLAB_B_ROWS, SLAB_COLS), lambda i: (0, 0)),
                ],
                out_specs=pl.BlockSpec((tb, HEAD_PAD), lambda i: (i, 0)),
            ),
            compiler_params=pltpu.CompilerParams(
                dimension_semantics=("parallel",)),
        )(obs_p, neg_p, packed["slab_w"], packed["slab_b"])

        logits = out[:, :ACTION_SPACE]
        value = out[:, ACTION_SPACE:ACTION_SPACE + 1]
        neg_out = out[:, ACTION_SPACE + 1:ACTION_SPACE + 1 + NEG_COLS]
        return logits, value, neg_out

    return forward


# =============================================================================
# One-time parameter packing (PyTorch (out,in) convention -> padded slabs)
# =============================================================================
def pack_params(p):
    def t(x):   # torch (out, in) -> (in, out)
        return np.asarray(x, np.float32).T

    wn, w1, w2 = t(p["wn"]), t(p["w1"]), t(p["w2"])
    wp, wv, wng = t(p["wp"]), t(p["wv"]), t(p["wng"])

    slab_w = np.zeros((SLAB_W_ROWS, SLAB_COLS), np.float32)
    slab_w[0:OBS_DIM, 0:NEG_DIM] = wn[:OBS_DIM]                 # wn_obs
    slab_w[0:NEG_DIM, 128:128 + NEG_DIM] = wn[OBS_DIM:]         # wn_neg
    slab_w[128:128 + OBS_DIM, 0:HID1] = w1[:OBS_DIM]            # w1_obs
    slab_w[256:256 + NEG_DIM, 0:HID1] = w1[OBS_DIM:]            # w1_neg
    slab_w[384:384 + HID1, 0:HID2] = w2                         # w2
    slab_w[384:384 + HID2, 128:128 + ACTION_SPACE] = wp         # policy
    slab_w[384:384 + HID2, 128 + ACTION_SPACE:129 + ACTION_SPACE] = wv
    slab_w[384:384 + HID2,
           129 + ACTION_SPACE:129 + ACTION_SPACE + NEG_COLS] = wng

    slab_b = np.zeros((SLAB_B_ROWS, SLAB_COLS), np.float32)
    slab_b[0, 0:NEG_DIM] = np.asarray(p["bn"], np.float32)
    slab_b[1, 0:HID1] = np.asarray(p["b1"], np.float32)
    slab_b[2, 0:HID2] = np.asarray(p["b2"], np.float32)
    slab_b[3, 0:ACTION_SPACE] = np.asarray(p["bp"], np.float32)
    slab_b[3, ACTION_SPACE] = np.asarray(p["bv"], np.float32)[0]
    slab_b[3, ACTION_SPACE + 1:ACTION_SPACE + 1 + NEG_COLS] = \
        np.asarray(p["bng"], np.float32)

    return {"slab_w": jnp.asarray(slab_w), "slab_b": jnp.asarray(slab_b)}


def init_params(key):
    ks = jax.random.split(key, 12)
    s = 0.1
    w = lambda k, shape: jax.random.normal(k, shape, jnp.float32) * s
    return {
        "wn": w(ks[0], (NEG_DIM, HID1)), "bn": w(ks[1], (NEG_DIM,)),
        "w1": w(ks[2], (HID1, HID1)), "b1": w(ks[3], (HID1,)),
        "w2": w(ks[4], (HID2, HID1)), "b2": w(ks[5], (HID2,)),
        "wp": w(ks[6], (ACTION_SPACE, HID2)), "bp": w(ks[7], (ACTION_SPACE,)),
        "wv": w(ks[8], (1, HID2)), "bv": w(ks[9], (1,)),
        "wng": w(ks[10], (NEG_COLS, HID2)), "bng": w(ks[11], (NEG_COLS,)),
    }


def reference_forward(obs, negotiation, p, *, agent_id, negotiation_map):
    """Pure-JAX reference (no noise) for correctness checking."""
    B = obs.shape[0]
    row_keep = jnp.array(
        [1.0 if (i in negotiation_map and agent_id in negotiation_map) else 0.0
         for i in range(NEG_ROWS)], jnp.float32)
    neg = (negotiation * row_keep[None, :, None]).reshape(B, NEG_DIM)
    x1 = jnp.concatenate([obs, neg], axis=-1)
    neg_gate = jnp.tanh(x1 @ p["wn"].T + p["bn"]) * neg
    x2 = jnp.concatenate([obs, neg_gate], axis=-1)
    h1 = jnp.maximum(x2 @ p["w1"].T + p["b1"], 0.0)
    emb = jnp.maximum(h1 @ p["w2"].T + p["b2"], 0.0)
    logits = emb @ p["wp"].T + p["bp"]
    value = emb @ p["wv"].T + p["bv"]
    neg_out = jnp.tanh(emb @ p["wng"].T + p["bng"])
    return logits, value, neg_out


if __name__ == "__main__":
    key = jax.random.PRNGKey(0)
    k_params, k_obs, k_neg, k_noise = jax.random.split(key, 4)

    B = 8                                # batch of agent steps (sublane multiple)
    agent_id = 0
    negotiation_map = {0, 1, 2}          # rows 3, 4 replaced by the zero dummy

    params = init_params(k_params)
    packed = pack_params(params)

    obs = jax.random.normal(k_obs, (B, OBS_DIM), jnp.float32)
    negotiation = jax.random.normal(k_neg, (B, NEG_ROWS, NEG_COLS), jnp.float32)

    # --- correctness check against pure-JAX reference (noise disabled) -------
    fwd_check = make_mlp2_forward(agent_id=agent_id,
                                  negotiation_map=negotiation_map,
                                  noise_scale=0.0)
    lg, vl, ng = fwd_check(obs, negotiation, packed, k_noise)
    rl, rv, rn = reference_forward(obs, negotiation, params,
                                   agent_id=agent_id,
                                   negotiation_map=negotiation_map)
    assert jnp.allclose(lg, rl, atol=1e-2, rtol=1e-2)
    assert jnp.allclose(vl, rv, atol=1e-2, rtol=1e-2)
    assert jnp.allclose(ng, rn, atol=1e-2, rtol=1e-2)

    # --- real forward: Gaussian noise (sigma = 0.1), as in the PyTorch module
    fwd = make_mlp2_forward(agent_id=agent_id,
                            negotiation_map=negotiation_map,
                            noise_scale=0.1)
    logits, value, neg_out = fwd(obs, negotiation, packed, k_noise)
    jax.block_until_ready((logits, value, neg_out))

    assert logits.shape == (B, ACTION_SPACE)
    assert value.shape == (B, 1)
    assert neg_out.shape == (B, NEG_COLS)
    assert bool(jnp.all(jnp.isfinite(logits)))
    assert bool(jnp.all(jnp.isfinite(value)))
    assert bool(jnp.all(jnp.isfinite(neg_out)))
    print("KERNEL_OK")
</pallas_src>

<mosaic_0001>
module attributes {stable_mosaic.version = 11 : i64} {
  func.func @mlp2_kernel(%arg0: i32, %arg1: memref<8x128xf32, #tpu.memory_space<vmem>>, %arg2: memref<8x128xf32, #tpu.memory_space<vmem>>, %arg3: memref<640x256xf32, #tpu.memory_space<vmem>>, %arg4: memref<8x256xf32, #tpu.memory_space<vmem>>, %arg5: memref<8x128xf32, #tpu.memory_space<vmem>>) attributes {dimension_semantics = [#tpu.dimension_semantics<parallel>], iteration_bounds = array<i64: 1>, scalar_prefetch = 0 : i64, scratch_operands = 0 : i64, tpu.core_type = #tpu.core_type<tc>, window_params = [{transform_indices = @transform_0, window_bounds = array<i64: 8, 128>}, {transform_indices = @transform_1, window_bounds = array<i64: 8, 128>}, {pipeline_mode = #tpu.pipeline_mode<synchronous>, transform_indices = @transform_2, window_bounds = array<i64: 640, 256>}, {pipeline_mode = #tpu.pipeline_mode<synchronous>, transform_indices = @transform_3, window_bounds = array<i64: 8, 256>}, {transform_indices = @transform_4, window_bounds = array<i64: 8, 128>}]} {
    %c0 = arith.constant 0 : index
    %c0_0 = arith.constant 0 : index
    %0 = vector.load %arg1[%c0, %c0_0] : memref<8x128xf32, #tpu.memory_space<vmem>>, vector<8x128xf32>
    %c0_1 = arith.constant 0 : index
    %c0_2 = arith.constant 0 : index
    %1 = vector.load %arg2[%c0_1, %c0_2] : memref<8x128xf32, #tpu.memory_space<vmem>>, vector<8x128xf32>
    %c0_3 = arith.constant 0 : index
    %c0_4 = arith.constant 0 : index
    %2 = vector.load %arg3[%c0_3, %c0_4] : memref<640x256xf32, #tpu.memory_space<vmem>>, vector<128x128xf32>
    %c0_5 = arith.constant 0 : index
    %c128 = arith.constant 128 : index
    %3 = vector.load %arg3[%c0_5, %c128] : memref<640x256xf32, #tpu.memory_space<vmem>>, vector<128x128xf32>
    %c128_6 = arith.constant 128 : index
    %c0_7 = arith.constant 0 : index
    %4 = vector.load %arg3[%c128_6, %c0_7] : memref<640x256xf32, #tpu.memory_space<vmem>>, vector<128x256xf32>
    %c256 = arith.constant 256 : index
    %c0_8 = arith.constant 0 : index
    %5 = vector.load %arg3[%c256, %c0_8] : memref<640x256xf32, #tpu.memory_space<vmem>>, vector<128x256xf32>
    %c384 = arith.constant 384 : index
    %c0_9 = arith.constant 0 : index
    %6 = vector.load %arg3[%c384, %c0_9] : memref<640x256xf32, #tpu.memory_space<vmem>>, vector<256x128xf32>
    %c384_10 = arith.constant 384 : index
    %c128_11 = arith.constant 128 : index
    %7 = vector.load %arg3[%c384_10, %c128_11] : memref<640x256xf32, #tpu.memory_space<vmem>>, vector<128x128xf32>
    %c0_12 = arith.constant 0 : index
    %c0_13 = arith.constant 0 : index
    %8 = vector.load %arg4[%c0_12, %c0_13] : memref<8x256xf32, #tpu.memory_space<vmem>>, vector<1x128xf32>
    %c1 = arith.constant 1 : index
    %c0_14 = arith.constant 0 : index
    %9 = vector.load %arg4[%c1, %c0_14] : memref<8x256xf32, #tpu.memory_space<vmem>>, vector<1x256xf32>
    %c2 = arith.constant 2 : index
    %c0_15 = arith.constant 0 : index
    %10 = vector.load %arg4[%c2, %c0_15] : memref<8x256xf32, #tpu.memory_space<vmem>>, vector<1x128xf32>
    %c3 = arith.constant 3 : index
    %c0_16 = arith.constant 0 : index
    %11 = vector.load %arg4[%c3, %c0_16] : memref<8x256xf32, #tpu.memory_space<vmem>>, vector<1x128xf32>
    %cst = arith.constant dense<0.000000e+00> : vector<8x128xf32>
    %12 = tpu.matmul %0, %2, %cst {dimension_numbers = #tpu.dot_dimension_numbers<[1], [0], [0], [1], [0, 0, 1, 1], [], []>} : vector<8x128xf32>, vector<128x128xf32>, vector<8x128xf32> -> vector<8x128xf32>
    %cst_17 = arith.constant dense<0.000000e+00> : vector<8x128xf32>
    %13 = tpu.matmul %1, %3, %cst_17 {dimension_numbers = #tpu.dot_dimension_numbers<[1], [0], [0], [1], [0, 0, 1, 1], [], []>} : vector<8x128xf32>, vector<128x128xf32>, vector<8x128xf32> -> vector<8x128xf32>
    %14 = arith.addf %12, %13 : vector<8x128xf32>
    %15 = vector.broadcast %8 : vector<1x128xf32> to vector<8x128xf32>
    %16 = arith.addf %14, %15 : vector<8x128xf32>
    %17 = math.tanh %16 : vector<8x128xf32>
    %18 = arith.mulf %17, %1 : vector<8x128xf32>
    %cst_18 = arith.constant dense<0.000000e+00> : vector<8x256xf32>
    %19 = tpu.matmul %0, %4, %cst_18 {dimension_numbers = #tpu.dot_dimension_numbers<[1], [0], [0], [1], [0, 0, 1, 1], [], []>} : vector<8x128xf32>, vector<128x256xf32>, vector<8x256xf32> -> vector<8x256xf32>
    %cst_19 = arith.constant dense<0.000000e+00> : vector<8x256xf32>
    %20 = tpu.matmul %18, %5, %cst_19 {dimension_numbers = #tpu.dot_dimension_numbers<[1], [0], [0], [1], [0, 0, 1, 1], [], []>} : vector<8x128xf32>, vector<128x256xf32>, vector<8x256xf32> -> vector<8x256xf32>
    %21 = arith.addf %19, %20 : vector<8x256xf32>
    %22 = vector.broadcast %9 : vector<1x256xf32> to vector<8x256xf32>
    %23 = arith.addf %21, %22 : vector<8x256xf32>
    %cst_20 = arith.constant 0.000000e+00 : f32
    %24 = vector.broadcast %cst_20 : f32 to vector<8x256xf32>
    %25 = arith.maximumf %23, %24 : vector<8x256xf32>
    %cst_21 = arith.constant dense<0.000000e+00> : vector<8x128xf32>
    %26 = tpu.matmul %25, %6, %cst_21 {dimension_numbers = #tpu.dot_dimension_numbers<[1], [0], [0], [1], [0, 0, 1, 1], [], []>} : vector<8x256xf32>, vector<256x128xf32>, vector<8x128xf32> -> vector<8x128xf32>
    %27 = vector.broadcast %10 : vector<1x128xf32> to vector<8x128xf32>
    %28 = arith.addf %26, %27 : vector<8x128xf32>
    %cst_22 = arith.constant 0.000000e+00 : f32
    %29 = vector.broadcast %cst_22 : f32 to vector<8x128xf32>
    %30 = arith.maximumf %28, %29 : vector<8x128xf32>
    %cst_23 = arith.constant dense<0.000000e+00> : vector<8x128xf32>
    %31 = tpu.matmul %30, %7, %cst_23 {dimension_numbers = #tpu.dot_dimension_numbers<[1], [0], [0], [1], [0, 0, 1, 1], [], []>} : vector<8x128xf32>, vector<128x128xf32>, vector<8x128xf32> -> vector<8x128xf32>
    %32 = vector.broadcast %11 : vector<1x128xf32> to vector<8x128xf32>
    %33 = arith.addf %31, %32 : vector<8x128xf32>
    %34 = tpu.iota {dimensions = array<i32: 1>} : vector<8x128xi32>
    %c9_i32 = arith.constant 9 : i32
    %35 = vector.broadcast %c9_i32 : i32 to vector<8x128xi32>
    %36 = arith.cmpi sge, %34, %35 : vector<8x128xi32>
    %c19_i32 = arith.constant 19 : i32
    %37 = vector.broadcast %c19_i32 : i32 to vector<8x128xi32>
    %38 = arith.cmpi slt, %34, %37 : vector<8x128xi32>
    %39 = arith.andi %36, %38 : vector<8x128xi1>
    %40 = math.tanh %33 : vector<8x128xf32>
    %41 = arith.select %39, %40, %33 : vector<8x128xi1>, vector<8x128xf32>
    %c0_24 = arith.constant 0 : index
    %c0_25 = arith.constant 0 : index
    %42 = vector.load %arg5[%c0_24, %c0_25] : memref<8x128xf32, #tpu.memory_space<vmem>>, vector<8x128xf32>
    tpu.vector_store %arg5[%c0_24, %c0_25], %41 {strides = array<i32>} : memref<8x128xf32, #tpu.memory_space<vmem>>, vector<8x128xf32>,
    return
  }
  func.func @transform_0(%arg0: i32) -> (i32, i32) {
    %c0_i32 = arith.constant 0 : i32
    %c0_i32_0 = arith.constant 0 : i32
    return %arg0, %c0_i32 : i32, i32
  }
  func.func @transform_1(%arg0: i32) -> (i32, i32) {
    %c0_i32 = arith.constant 0 : i32
    %c0_i32_0 = arith.constant 0 : i32
    return %arg0, %c0_i32 : i32, i32
  }
  func.func @transform_2(%arg0: i32) -> (i32, i32) {
    %c0_i32 = arith.constant 0 : i32
    %c0_i32_0 = arith.constant 0 : i32
    %c0_i32_1 = arith.constant 0 : i32
    return %c0_i32, %c0_i32_0 : i32, i32
  }
  func.func @transform_3(%arg0: i32) -> (i32, i32) {
    %c0_i32 = arith.constant 0 : i32
    %c0_i32_0 = arith.constant 0 : i32
    %c0_i32_1 = arith.constant 0 : i32
    return %c0_i32, %c0_i32_0 : i32, i32
  }
  func.func @transform_4(%arg0: i32) -> (i32, i32) {
    %c0_i32 = arith.constant 0 : i32
    %c0_i32_0 = arith.constant 0 : i32
    return %arg0, %c0_i32 : i32, i32
  }
}

</mosaic_0001>

<llo_original>
// kernel: forward.1
$region0: #{forward.1}
  #allocation0 [shape = 'u32[]', space=smem, size = 0x4, offset = 0x4, fixed_abs, tag = 'smem constant byte address 0x4 - core index']
  #allocation1 [shape = 'u32[72,128]{1,0:T(1,128)}', space=vmem, size = 0x9000, scoped, tag = 'internal scratch']
  %s0 = inlined_call_operand.vmem [shape: f32[8,128], index: 0, kind: input, shape index: {}]
  %s1 = inlined_call_operand.vmem [shape: f32[8,128], index: 1, kind: input, shape index: {}]
  %s2 = inlined_call_operand.hbm [shape: f32[640,256], index: 2, kind: input, shape index: {}]
  %s3 = inlined_call_operand.vmem [shape: f32[8,256], index: 3, kind: input, shape index: {}]
  %s4 = inlined_call_operand.vmem [shape: f32[8,128], index: 4, kind: output, shape index: {}]
  %s5 = sld [smem:[#allocation0]]
  $region30: #{forward.1} parent=0
    _
  %s7 = ssub.s32 1, %s5
  %s8 = scalar_select 0, %s7, %s5
  $region1: #{forward.1} parent=0
    #allocation2 [shape = 'u8[655360]{0}', space=vmem, size = 0xa0000, scoped, tag = 'input window, operand 2, single buffered']
    #allocation3 [shape = 's32[1]{0}', space=sflag, size = 0x4, scoped, tag = 'scoped memory for forward.1']
    %9 = vsyncpa [#allocation3], 0
    // Predicated region
    $region2: #{forward.1} parent=1 // pred_check
      _
    $region3: #{forward.1} parent=1 // pred_check_branch
      %11 = sbr.rel (0) target = $region5
    $region4: #{forward.1} parent=1 // pred_region
      _
    $region5: #{forward.1} parent=1 // pred_fallthru
      _
    // Predicated region
    $region6: #{forward.1} parent=1 // pred_check
      _
    $region7: #{forward.1} parent=1 // pred_check_branch
      %13 = sbr.rel (0) target = $region9
    $region8: #{forward.1} parent=1 // pred_region
      _
    $region9: #{forward.1} parent=1 // pred_fallthru
      _
    // Predicated region
    $region10: #{forward.1} parent=1 // pred_check
      _
    $region11: #{forward.1} parent=1 // pred_check_branch
      %15 = sbr.rel (0) target = $region13
    $region12: #{forward.1} parent=1 // pred_region
      %17 = vsyncadd [#allocation3], 0
      %s18 = sshll.u32 %s2, 4
      %s19 = int_to_ptr.hbm [resolvable:$true] %s18
      %s20 = sshll.u32 [#allocation2], 4
      %s21 = int_to_ptr.vmem [resolvable:$true] %s20
      %26 = dma.hbm_to_vmem [thread:$0]  %s19, 20480, %s21, [#allocation3], 256, 256, 16
    $region13: #{forward.1} parent=1 // pred_fallthru
      _
    // Predicated region
    $region14: #{forward.1} parent=1 // pred_check
      _
    $region15: #{forward.1} parent=1 // pred_check_branch
      %28 = sbr.rel (0) target = $region17
    $region16: #{forward.1} parent=1 // pred_region
      _
    $region17: #{forward.1} parent=1 // pred_fallthru
      _
    // Predicated region
    $region18: #{forward.1} parent=1 // pred_check
      _
    $region19: #{forward.1} parent=1 // pred_check_branch
      %30 = sbr.rel (0) target = $region21
    $region20: #{forward.1} parent=1 // pred_region
      %32 = dma.done [#allocation3], 20480
    $region21: #{forward.1} parent=1 // pred_fallthru
      _
    %v33 = vld [vmem:[%s0] sm:$0xff]
    %v34 = vld [vmem:[%s1] sm:$0xff]
    %v35 = vld [vmem:[#allocation2] sm:$0xff]
    %v36 = vld [vmem:[#allocation2 + $0x10] sm:$0xff]
    %v37 = vld [vmem:[#allocation2 + $0x20] sm:$0xff]
    %v38 = vld [vmem:[#allocation2 + $0x30] sm:$0xff]
    %v39 = vld [vmem:[#allocation2 + $0x40] sm:$0xff]
    %v40 = vld [vmem:[#allocation2 + $0x50] sm:$0xff]
    %v41 = vld [vmem:[#allocation2 + $0x60] sm:$0xff]
    %v42 = vld [vmem:[#allocation2 + $0x70] sm:$0xff]
    %v43 = vld [vmem:[#allocation2 + $0x80] sm:$0xff]
    %v44 = vld [vmem:[#allocation2 + $0x90] sm:$0xff]
    %v45 = vld [vmem:[#allocation2 + $0xa0] sm:$0xff]
    %v46 = vld [vmem:[#allocation2 + $0xb0] sm:$0xff]
    %v47 = vld [vmem:[#allocation2 + $0xc0] sm:$0xff]
    %v48 = vld [vmem:[#allocation2 + $0xd0] sm:$0xff]
    %v49 = vld [vmem:[#allocation2 + $0xe0] sm:$0xff]
    %v50 = vld [vmem:[#allocation2 + $0xf0] sm:$0xff]
    %v51 = vld [vmem:[#allocation2 + $0x8] sm:$0xff]
    %v52 = vld [vmem:[#allocation2 + $0x18] sm:$0xff]
    %v53 = vld [vmem:[#allocation2 + $0x28] sm:$0xff]
    %v54 = vld [vmem:[#allocation2 + $0x38] sm:$0xff]
    %v55 = vld [vmem:[#allocation2 + $0x48] sm:$0xff]
    %v56 = vld [vmem:[#allocation2 + $0x58] sm:$0xff]
    %v57 = vld [vmem:[#allocation2 + $0x68] sm:$0xff]
    %v58 = vld [vmem:[#allocation2 + $0x78] sm:$0xff]
    %v59 = vld [vmem:[#allocation2 + $0x88] sm:$0xff]
    %v60 = vld [vmem:[#allocation2 + $0x98] sm:$0xff]
    %v61 = vld [vmem:[#allocation2 + $0xa8] sm:$0xff]
    %v62 = vld [vmem:[#allocation2 + $0xb8] sm:$0xff]
    %v63 = vld [vmem:[#allocation2 + $0xc8] sm:$0xff]
    %v64 = vld [vmem:[#allocation2 + $0xd8] sm:$0xff]
    %v65 = vld [vmem:[#allocation2 + $0xe8] sm:$0xff]
    %v66 = vld [vmem:[#allocation2 + $0xf8] sm:$0xff]
    %v67 = vld [vmem:[#allocation2 + $0x100] sm:$0xff]
    %v68 = vld [vmem:[#allocation2 + $0x108] sm:$0xff]
    %v69 = vld [vmem:[#allocation2 + $0x110] sm:$0xff]
    %v70 = vld [vmem:[#allocation2 + $0x118] sm:$0xff]
    %v71 = vld [vmem:[#allocation2 + $0x120] sm:$0xff]
    %v72 = vld [vmem:[#allocation2 + $0x128] sm:$0xff]
    %v73 = vld [vmem:[#allocation2 + $0x130] sm:$0xff]
    %v74 = vld [vmem:[#allocation2 + $0x138] sm:$0xff]
    %v75 = vld [vmem:[#allocation2 + $0x140] sm:$0xff]
    %v76 = vld [vmem:[#allocation2 + $0x148] sm:$0xff]
    %v77 = vld [vmem:[#allocation2 + $0x150] sm:$0xff]
    %v78 = vld [vmem:[#allocation2 + $0x158] sm:$0xff]
    %v79 = vld [vmem:[#allocation2 + $0x160] sm:$0xff]
    %v80 = vld [vmem:[#allocation2 + $0x168] sm:$0xff]
    %v81 = vld [vmem:[#allocation2 + $0x170] sm:$0xff]
    %v82 = vld [vmem:[#allocation2 + $0x178] sm:$0xff]
    %v83 = vld [vmem:[#allocation2 + $0x180] sm:$0xff]
    %v84 = vld [vmem:[#allocation2 + $0x188] sm:$0xff]
    %v85 = vld [vmem:[#allocation2 + $0x190] sm:$0xff]
    %v86 = vld [vmem:[#allocation2 + $0x198] sm:$0xff]
    %v87 = vld [vmem:[#allocation2 + $0x1a0] sm:$0xff]
    %v88 = vld [vmem:[#allocation2 + $0x1a8] sm:$0xff]
    %v89 = vld [vmem:[#allocation2 + $0x1b0] sm:$0xff]
    %v90 = vld [vmem:[#allocation2 + $0x1b8] sm:$0xff]
    %v91 = vld [vmem:[#allocation2 + $0x1c0] sm:$0xff]
    %v92 = vld [vmem:[#allocation2 + $0x1c8] sm:$0xff]
    %v93 = vld [vmem:[#allocation2 + $0x1d0] sm:$0xff]
    %v94 = vld [vmem:[#allocation2 + $0x1d8] sm:$0xff]
    %v95 = vld [vmem:[#allocation2 + $0x1e0] sm:$0xff]
    %v96 = vld [vmem:[#allocation2 + $0x1e8] sm:$0xff]
    %v97 = vld [vmem:[#allocation2 + $0x1f0] sm:$0xff]
    %v98 = vld [vmem:[#allocation2 + $0x1f8] sm:$0xff]
    %v99 = vld [vmem:[#allocation2 + $0x200] sm:$0xff]
    %v100 = vld [vmem:[#allocation2 + $0x208] sm:$0xff]
    %v101 = vld [vmem:[#allocation2 + $0x210] sm:$0xff]
    %v102 = vld [vmem:[#allocation2 + $0x218] sm:$0xff]
    %v103 = vld [vmem:[#allocation2 + $0x220] sm:$0xff]
    %v104 = vld [vmem:[#allocation2 + $0x228] sm:$0xff]
    %v105 = vld [vmem:[#allocation2 + $0x230] sm:$0xff]
    %v106 = vld [vmem:[#allocation2 + $0x238] sm:$0xff]
    %v107 = vld [vmem:[#allocation2 + $0x240] sm:$0xff]
    %v108 = vld [vmem:[#allocation2 + $0x248] sm:$0xff]
    %v109 = vld [vmem:[#allocation2 + $0x250] sm:$0xff]
    %v110 = vld [vmem:[#allocation2 + $0x258] sm:$0xff]
    %v111 = vld [vmem:[#allocation2 + $0x260] sm:$0xff]
    %v112 = vld [vmem:[#allocation2 + $0x268] sm:$0xff]
    %v113 = vld [vmem:[#allocation2 + $0x270] sm:$0xff]
    %v114 = vld [vmem:[#allocation2 + $0x278] sm:$0xff]
    %v115 = vld [vmem:[#allocation2 + $0x280] sm:$0xff]
    %v116 = vld [vmem:[#allocation2 + $0x288] sm:$0xff]
    %v117 = vld [vmem:[#allocation2 + $0x290] sm:$0xff]
    %v118 = vld [vmem:[#allocation2 + $0x298] sm:$0xff]
    %v119 = vld [vmem:[#allocation2 + $0x2a0] sm:$0xff]
    %v120 = vld [vmem:[#allocation2 + $0x2a8] sm:$0xff]
    %v121 = vld [vmem:[#allocation2 + $0x2b0] sm:$0xff]
    %v122 = vld [vmem:[#allocation2 + $0x2b8] sm:$0xff]
    %v123 = vld [vmem:[#allocation2 + $0x2c0] sm:$0xff]
    %v124 = vld [vmem:[#allocation2 + $0x2c8] sm:$0xff]
    %v125 = vld [vmem:[#allocation2 + $0x2d0] sm:$0xff]
    %v126 = vld [vmem:[#allocation2 + $0x2d8] sm:$0xff]
    %v127 = vld [vmem:[#allocation2 + $0x2e0] sm:$0xff]
    %v128 = vld [vmem:[#allocation2 + $0x2e8] sm:$0xff]
    %v129 = vld [vmem:[#allocation2 + $0x2f0] sm:$0xff]
    %v130 = vld [vmem:[#allocation2 + $0x2f8] sm:$0xff]
    %v131 = vld [vmem:[#allocation2 + $0x300] sm:$0xff]
    %v132 = vld [vmem:[#allocation2 + $0x310] sm:$0xff]
    %v133 = vld [vmem:[#allocation2 + $0x320] sm:$0xff]
    %v134 = vld [vmem:[#allocation2 + $0x330] sm:$0xff]
    %v135 = vld [vmem:[#allocation2 + $0x340] sm:$0xff]
    %v136 = vld [vmem:[#allocation2 + $0x350] sm:$0xff]
    %v137 = vld [vmem:[#allocation2 + $0x360] sm:$0xff]
    %v138 = vld [vmem:[#allocation2 + $0x370] sm:$0xff]
    %v139 = vld [vmem:[#allocation2 + $0x380] sm:$0xff]
    %v140 = vld [vmem:[#allocation2 + $0x390] sm:$0xff]
    %v141 = vld [vmem:[#allocation2 + $0x3a0] sm:$0xff]
    %v142 = vld [vmem:[#allocation2 + $0x3b0] sm:$0xff]
    %v143 = vld [vmem:[#allocation2 + $0x3c0] sm:$0xff]
    %v144 = vld [vmem:[#allocation2 + $0x3d0] sm:$0xff]
    %v145 = vld [vmem:[#allocation2 + $0x3e0] sm:$0xff]
    %v146 = vld [vmem:[#allocation2 + $0x3f0] sm:$0xff]
    %v147 = vld [vmem:[#allocation2 + $0x400] sm:$0xff]
    %v148 = vld [vmem:[#allocation2 + $0x410] sm:$0xff]
    %v149 = vld [vmem:[#allocation2 + $0x420] sm:$0xff]
    %v150 = vld [vmem:[#allocation2 + $0x430] sm:$0xff]
    %v151 = vld [vmem:[#allocation2 + $0x440] sm:$0xff]
    %v152 = vld [vmem:[#allocation2 + $0x450] sm:$0xff]
    %v153 = vld [vmem:[#allocation2 + $0x460] sm:$0xff]
    %v154 = vld [vmem:[#allocation2 + $0x470] sm:$0xff]
    %v155 = vld [vmem:[#allocation2 + $0x480] sm:$0xff]
    %v156 = vld [vmem:[#allocation2 + $0x490] sm:$0xff]
    %v157 = vld [vmem:[#allocation2 + $0x4a0] sm:$0xff]
    %v158 = vld [vmem:[#allocation2 + $0x4b0] sm:$0xff]
    %v159 = vld [vmem:[#allocation2 + $0x4c0] sm:$0xff]
    %v160 = vld [vmem:[#allocation2 + $0x4d0] sm:$0xff]
    %v161 = vld [vmem:[#allocation2 + $0x4e0] sm:$0xff]
    %v162 = vld [vmem:[#allocation2 + $0x4f0] sm:$0xff]
    %v163 = vld [vmem:[#allocation2 + $0x308] sm:$0xff]
    %v164 = vld [vmem:[#allocation2 + $0x318] sm:$0xff]
    %v165 = vld [vmem:[#allocation2 + $0x328] sm:$0xff]
    %v166 = vld [vmem:[#allocation2 + $0x338] sm:$0xff]
    %v167 = vld [vmem:[#allocation2 + $0x348] sm:$0xff]
    %v168 = vld [vmem:[#allocation2 + $0x358] sm:$0xff]
    %v169 = vld [vmem:[#allocation2 + $0x368] sm:$0xff]
    %v170 = vld [vmem:[#allocation2 + $0x378] sm:$0xff]
    %v171 = vld [vmem:[#allocation2 + $0x388] sm:$0xff]
    %v172 = vld [vmem:[#allocation2 + $0x398] sm:$0xff]
    %v173 = vld [vmem:[#allocation2 + $0x3a8] sm:$0xff]
    %v174 = vld [vmem:[#allocation2 + $0x3b8] sm:$0xff]
    %v175 = vld [vmem:[#allocation2 + $0x3c8] sm:$0xff]
    %v176 = vld [vmem:[#allocation2 + $0x3d8] sm:$0xff]
    %v177 = vld [vmem:[#allocation2 + $0x3e8] sm:$0xff]
    %v178 = vld [vmem:[#allocation2 + $0x3f8] sm:$0xff]
    %v179 = vld [vmem:[%s3] ss:$0 sm:$0xff]
    %s180 = scalar_lea.vmem %s3, 1
    %v181 = vld [vmem:[%s180] ss:$8 sm:$0x3]
    %v182 = vld [vmem:[%s3 + $0x2] ss:$0 sm:$0xff]
    %v183 = vld [vmem:[%s3 + $0x3] ss:$0 sm:$0xff]
    %184 = vmatpush.msra.mxu0 %v66
    %185 = vmatpush.msra.mxu0 %v65
    %186 = vmatpush.msra.mxu0 %v64
    %187 = vmatpush.msra.mxu0 %v63
    %188 = vmatpush.msra.mxu0 %v62
    %189 = vmatpush.msra.mxu0 %v61
    %190 = vmatpush.msra.mxu0 %v60
    %191 = vmatpush.msra.mxu0 %v59
    %192 = vmatpush.msra.mxu0 %v58
    %193 = vmatpush.msra.mxu0 %v57
    %194 = vmatpush.msra.mxu0 %v56
    %195 = vmatpush.msra.mxu0 %v55
    %196 = vmatpush.msra.mxu0 %v54
    %197 = vmatpush.msra.mxu0 %v53
    %198 = vmatpush.msra.mxu0 %v52
    %199 = vmatpush.msra.mxu0 %v51
    %200 = vmatmul.f32.gmra.mxu0 %v34
    %v201 = vpop.f32.mrf.mxu0
    %v202 = vadd.f32 0.0, %v201
    %203 = vdwg.mxu0
    %204 = vmatpush.msra.mxu0 %v50
    %205 = vmatpush.msra.mxu0 %v49
    %206 = vmatpush.msra.mxu0 %v48
    %207 = vmatpush.msra.mxu0 %v47
    %208 = vmatpush.msra.mxu0 %v46
    %209 = vmatpush.msra.mxu0 %v45
    %210 = vmatpush.msra.mxu0 %v44
    %211 = vmatpush.msra.mxu0 %v43
    %212 = vmatpush.msra.mxu0 %v42
    %213 = vmatpush.msra.mxu0 %v41
    %214 = vmatpush.msra.mxu0 %v40
    %215 = vmatpush.msra.mxu0 %v39
    %216 = vmatpush.msra.mxu0 %v38
    %217 = vmatpush.msra.mxu0 %v37
    %218 = vmatpush.msra.mxu0 %v36
    %219 = vmatpush.msra.mxu0 %v35
    %220 = vmatmul.f32.gmra.mxu0 %v33
    %v221 = vpop.f32.mrf.mxu0
    %v222 = vadd.f32 %v202, %v221
    %223 = vdwg.mxu0
    %v224 = vadd.f32 %v222, %v179
    %v225 = vtanh.pop %v224
    %v226 = vmul.f32 %v225, %v34
    %227 = vmatpush.msra.mxu0 %v129
    %228 = vmatpush.msra.mxu0 %v127
    %229 = vmatpush.msra.mxu0 %v125
    %230 = vmatpush.msra.mxu0 %v123
    %231 = vmatpush.msra.mxu0 %v121
    %232 = vmatpush.msra.mxu0 %v119
    %233 = vmatpush.msra.mxu0 %v117
    %234 = vmatpush.msra.mxu0 %v115
    %235 = vmatpush.msra.mxu0 %v113
    %236 = vmatpush.msra.mxu0 %v111
    %237 = vmatpush.msra.mxu0 %v109
    %238 = vmatpush.msra.mxu0 %v107
    %239 = vmatpush.msra.mxu0 %v105
    %240 = vmatpush.msra.mxu0 %v103
    %241 = vmatpush.msra.mxu0 %v101
    %242 = vmatpush.msra.mxu0 %v99
    %243 = vmatmul.f32.gmra.mxu0 %v226
    %v244 = vpop.f32.mrf.mxu0
    %v245 = vadd.f32 0.0, %v244
    %246 = vdwg.mxu0
    %247 = vmatpush.msra.mxu0 %v130
    %248 = vmatpush.msra.mxu0 %v128
    %249 = vmatpush.msra.mxu0 %v126
    %250 = vmatpush.msra.mxu0 %v124
    %251 = vmatpush.msra.mxu0 %v122
    %252 = vmatpush.msra.mxu0 %v120
    %253 = vmatpush.msra.mxu0 %v118
    %254 = vmatpush.msra.mxu0 %v116
    %255 = vmatpush.msra.mxu0 %v114
    %256 = vmatpush.msra.mxu0 %v112
    %257 = vmatpush.msra.mxu0 %v110
    %258 = vmatpush.msra.mxu0 %v108
    %259 = vmatpush.msra.mxu0 %v106
    %260 = vmatpush.msra.mxu0 %v104
    %261 = vmatpush.msra.mxu0 %v102
    %262 = vmatpush.msra.mxu0 %v100
    %263 = vmatmul.f32.gmra.mxu0 %v226
    %v264 = vpop.f32.mrf.mxu0
    %v265 = vadd.f32 0.0, %v264
    %266 = vdwg.mxu0
    %267 = vmatpush.msra.mxu0 %v97
    %268 = vmatpush.msra.mxu0 %v95
    %269 = vmatpush.msra.mxu0 %v93
    %270 = vmatpush.msra.mxu0 %v91
    %271 = vmatpush.msra.mxu0 %v89
    %272 = vmatpush.msra.mxu0 %v87
    %273 = vmatpush.msra.mxu0 %v85
    %274 = vmatpush.msra.mxu0 %v83
    %275 = vmatpush.msra.mxu0 %v81
    %276 = vmatpush.msra.mxu0 %v79
    %277 = vmatpush.msra.mxu0 %v77
    %278 = vmatpush.msra.mxu0 %v75
    %279 = vmatpush.msra.mxu0 %v73
    %280 = vmatpush.msra.mxu0 %v71
    %281 = vmatpush.msra.mxu0 %v69
    %282 = vmatpush.msra.mxu0 %v67
    %283 = vmatmul.f32.gmra.mxu0 %v33
    %v284 = vpop.f32.mrf.mxu0
    %v285 = vadd.f32 %v245, %v284
    %286 = vdwg.mxu0
    %287 = vmatpush.msra.mxu0 %v98
    %288 = vmatpush.msra.mxu0 %v96
    %289 = vmatpush.msra.mxu0 %v94
    %290 = vmatpush.msra.mxu0 %v92
    %291 = vmatpush.msra.mxu0 %v90
    %292 = vmatpush.msra.mxu0 %v88
    %293 = vmatpush.msra.mxu0 %v86
    %294 = vmatpush.msra.mxu0 %v84
    %295 = vmatpush.msra.mxu0 %v82
    %296 = vmatpush.msra.mxu0 %v80
    %297 = vmatpush.msra.mxu0 %v78
    %298 = vmatpush.msra.mxu0 %v76
    %299 = vmatpush.msra.mxu0 %v74
    %300 = vmatpush.msra.mxu0 %v72
    %301 = vmatpush.msra.mxu0 %v70
    %302 = vmatpush.msra.mxu0 %v68
    %303 = vmatmul.f32.gmra.mxu0 %v33
    %v304 = vpop.f32.mrf.mxu0
    %v305 = vadd.f32 %v265, %v304
    %306 = vdwg.mxu0
    %v308 = vperm.slane %v181, 0
    %v309 = vperm.slane %v181, 1
    %v312 = vadd.f32 %v285, %v308
    %v313 = vadd.f32 %v305, %v309
    %v314 = vmax.f32 %v312, 0.0
    %v315 = vmax.f32 %v313, 0.0
    %316 = vmatpush.msra.mxu0 %v146
    %317 = vmatpush.msra.mxu0 %v145
    %318 = vmatpush.msra.mxu0 %v144
    %319 = vmatpush.msra.mxu0 %v143
    %320 = vmatpush.msra.mxu0 %v142
    %321 = vmatpush.msra.mxu0 %v141
    %322 = vmatpush.msra.mxu0 %v140
    %323 = vmatpush.msra.mxu0 %v139
    %324 = vmatpush.msra.mxu0 %v138
    %325 = vmatpush.msra.mxu0 %v137
    %326 = vmatpush.msra.mxu0 %v136
    %327 = vmatpush.msra.mxu0 %v135
    %328 = vmatpush.msra.mxu0 %v134
    %329 = vmatpush.msra.mxu0 %v133
    %330 = vmatpush.msra.mxu0 %v132
    %331 = vmatpush.msra.mxu0 %v131
    %332 = vmatmul.f32.gmra.mxu0 %v314
    %v333 = vpop.f32.mrf.mxu0
    %v334 = vadd.f32 %v182, %v333
    %335 = vdwg.mxu0
    %336 = vmatpush.msra.mxu0 %v162
    %337 = vmatpush.msra.mxu0 %v161
    %338 = vmatpush.msra.mxu0 %v160
    %339 = vmatpush.msra.mxu0 %v159
    %340 = vmatpush.msra.mxu0 %v158
    %341 = vmatpush.msra.mxu0 %v157
    %342 = vmatpush.msra.mxu0 %v156
    %343 = vmatpush.msra.mxu0 %v155
    %344 = vmatpush.msra.mxu0 %v154
    %345 = vmatpush.msra.mxu0 %v153
    %346 = vmatpush.msra.mxu0 %v152
    %347 = vmatpush.msra.mxu0 %v151
    %348 = vmatpush.msra.mxu0 %v150
    %349 = vmatpush.msra.mxu0 %v149
    %350 = vmatpush.msra.mxu0 %v148
    %351 = vmatpush.msra.mxu0 %v147
    %352 = vmatmul.f32.gmra.mxu0 %v315
    %v353 = vpop.f32.mrf.mxu0
    %v354 = vadd.f32 %v334, %v353
    %355 = vdwg.mxu0
    %v356 = vmax.f32 %v354, 0.0
    %357 = vmatpush.msra.mxu0 %v178
    %358 = vmatpush.msra.mxu0 %v177
    %359 = vmatpush.msra.mxu0 %v176
    %360 = vmatpush.msra.mxu0 %v175
    %361 = vmatpush.msra.mxu0 %v174
    %362 = vmatpush.msra.mxu0 %v173
    %363 = vmatpush.msra.mxu0 %v172
    %364 = vmatpush.msra.mxu0 %v171
    %365 = vmatpush.msra.mxu0 %v170
    %366 = vmatpush.msra.mxu0 %v169
    %367 = vmatpush.msra.mxu0 %v168
    %368 = vmatpush.msra.mxu0 %v167
    %369 = vmatpush.msra.mxu0 %v166
    %370 = vmatpush.msra.mxu0 %v165
    %371 = vmatpush.msra.mxu0 %v164
    %372 = vmatpush.msra.mxu0 %v163
    %373 = vmatmul.f32.gmra.mxu0 %v356
    %v374 = vpop.f32.mrf.mxu0
    %v375 = vadd.f32 %v183, %v374
    %376 = vdwg.mxu0
    %v377 = vlaneseq
    %v378 = vand.u32 %v377, 127
    %vm379 = vcmp.ge.s32.totalorder %v378, 9
    %vm380 = vcmp.lt.s32.totalorder %v378, 19
    %vm381 = vmand %vm379, %vm380
    %v382 = vtanh.pop %v375
    %v383 = vsel %vm381, %v382, %v375
    %384 = vst [vmem:[%s4] sm:$0xff] %v383
    // Predicated region
    $region22: #{forward.1} parent=1 // pred_check
      _
    $region23: #{forward.1} parent=1 // pred_check_branch
      %386 = sbr.rel (0) target = $region25
    $region24: #{forward.1} parent=1 // pred_region
      _
    $region25: #{forward.1} parent=1 // pred_fallthru
      _
    // Predicated region
    $region26: #{forward.1} parent=1 // pred_check
      _
    $region27: #{forward.1} parent=1 // pred_check_branch
      %388 = sbr.rel (0) target = $region29
    $region28: #{forward.1} parent=1 // pred_region
      _
    $region29: #{forward.1} parent=1 // pred_fallthru
      _
    %389 = vsyncpa [#allocation3], 1

</llo_original>
